<compile_context>
chip_gen: v5e
topology: v5e:2x2
jax: 0.10.0
libtpu: 0.0.40
codegen_flags: <defaults>
</compile_context>

<pallas_src>
import functools

import numpy as np
import jax
import jax.numpy as jnp
from jax import lax
from jax.experimental import pallas as pl
from jax.experimental.pallas import tpu as pltpu

_SQRT2 = 1.4142135623730951


def _softplus(x):
    return jnp.maximum(x, 0.0) + jnp.log(1.0 + jnp.exp(-jnp.abs(x)))


def _norm_logcdf_exact(z):
    # Numerically stable log(Phi(z)) from the A&S 7.1.26 erfc form:
    #   erfc(x) ~= poly(t) * exp(-x^2),  t = 1/(1 + 0.3275911 x),  x >= 0.
    # For z <= 0 we stay in log space (log(0.5*poly) - x^2), avoiding the
    # cancellation / log(0) that log(0.5*(1+erf)) hits for negative z.
    x = jnp.abs(z) * (1.0 / _SQRT2)
    t = 1.0 / (1.0 + 0.3275911 * x)
    poly = t * (0.254829592 + t * (-0.284496736 + t * (1.421413741
              + t * (-1.453152027 + t * 1.061405429))))
    neg_branch = jnp.log(0.5 * poly) - x * x          # = log Phi(z)  for z <= 0
    half_erfc = 0.5 * poly * jnp.exp(-x * x)          # = 1 - Phi(z)  for z >= 0
    pos_branch = jnp.log(1.0 - half_erfc)
    return jnp.where(z <= 0.0, neg_branch, pos_branch)


def _norm_logcdf_approx(z):
    # Approximation the torch module switches to when any z < -7.
    # NOTE: both sub-branches are evaluated; discarded lanes may be non-finite
    # (forward values are fine; grads through this would need masking).
    return jnp.where(
        z < -0.1,
        -0.5 * z * z - 4.8 + 2509.0 * (z - 13.0) / ((z - 40.0) ** 2 * (z - 5.0)),
        -jnp.exp(-2.0 * z) * 0.5 - jnp.exp(-(z - 0.2) ** 2) * 0.2,
    )


def _skew_nll_kernel(x_dim, t_total, mm_dtype, act_dtype, approx_recip,
                     w_ref, d_ref,
                     w1_ref, b1_ref, w2_ref, b2_ref, w3_ref, b3_ref,
                     out_ref, logcdf_ref):
    tb = w_ref.shape[0]                       # time steps in this tile (lane axis)
    contract = (((1,), (1,)), ((), ()))       # A(.,k) x B(.,k) -> A @ B^T

    # --- fused 3-branch MLP, activations in [features, TB] layout -----------
    x_blk = w_ref[...].astype(mm_dtype)                                # (TB, F_in)
    a1 = lax.dot_general(w1_ref[...], x_blk, contract,
                         preferred_element_type=jnp.float32)           # (96, TB)
    h1 = jnp.tanh((a1 + b1_ref[...]).astype(act_dtype))
    a2 = jnp.dot(w2_ref[...], h1.astype(mm_dtype),
                 preferred_element_type=jnp.float32)                   # (160, TB)
    h2 = jnp.tanh((a2 + b2_ref[...]).astype(act_dtype))
    h3 = jnp.dot(w3_ref[...], h2.astype(mm_dtype),
                 preferred_element_type=jnp.float32) + b3_ref[...]     # (48, TB)

    mu = h3[0 * x_dim:1 * x_dim, :]
    sig = 10.0 * _softplus(h3[1 * x_dim:2 * x_dim, :])
    alpha = h3[2 * x_dim:3 * x_dim, :]

    # data^T via an identity matmul on the (under-used) MXU: avoids a host-side
    # transpose copy and an odd-shaped in-kernel vector transpose.
    eye = (lax.broadcasted_iota(jnp.int32, (x_dim, x_dim), 0)
           == lax.broadcasted_iota(jnp.int32, (x_dim, x_dim), 1)).astype(jnp.float32)
    d_t = lax.dot_general(eye, d_ref[...], contract,
                          preferred_element_type=jnp.float32)          # (x_dim, TB)

    diff = d_t - mu
    inv_sig = pl.reciprocal(sig, approx=approx_recip)
    diff_scaled = diff * inv_sig
    z = alpha * diff_scaled

    # "-7 switch": padded tail lanes are masked out of the min so they can't
    # flip the branch for real lanes.
    t_idx = lax.broadcasted_iota(jnp.int32, (1, tb), 1) + pl.program_id(0) * tb
    valid = t_idx < t_total
    min_z = jnp.min(jnp.where(valid, z, 0.0))
    use_approx = min_z < -7.0

    # TODO(synk): torch applies the -7 switch globally over all T; here it is
    # applied per lane tile (exact parity whenever the whole T axis is one block).
    @pl.when(use_approx)
    def _():
        logcdf_ref[...] = _norm_logcdf_approx(z)

    @pl.when(jnp.logical_not(use_approx))
    def _():
        logcdf_ref[...] = _norm_logcdf_exact(z)

    losses = 0.5 * diff_scaled * diff_scaled + jnp.log(sig) - logcdf_ref[...]
    # Lane-dense output: mean over x_dim (sublane axis) -> one (1, TB) row.
    out_ref[...] = jnp.mean(losses, axis=0, keepdims=True)


class GEFComSkewNLL:
    """JAX/Pallas port of the torch GEFComSkewNLL forward pass."""

    def __init__(self, x_dim, num_freqs, n, key):
        self.x_dim = x_dim
        self.num_freqs = list(num_freqs)
        self.n = n
        self.total_freqs = sum(num_freqs)
        self.param_idxs = []
        cumul = 0
        for nf in num_freqs:
            idxs = np.concatenate([cumul + np.arange(nf),
                                   self.total_freqs + cumul + np.arange(nf)])
            self.param_idxs.append(idxs)
            cumul += nf

        # Per-branch params in torch nn.Linear layout: W [out, in], b [out];
        # uniform(+-1/sqrt(fan_in)) init mimics nn.Linear defaults.
        dims = {
            'mu':  (2 * num_freqs[0] + 1, n, 64, x_dim),
            'sig': (2 * num_freqs[1] + 1, n, 64, x_dim),
            'a':   (2 * num_freqs[2] + 1, n, 32, x_dim),
        }
        keys = jax.random.split(key, 18)
        ki = 0
        self.params = {}
        for name, ds in dims.items():
            layers = []
            for fin, fout in zip(ds[:-1], ds[1:]):
                bound = 1.0 / np.sqrt(fin)
                W = jax.random.uniform(keys[ki], (fout, fin), jnp.float32, -bound, bound)
                ki += 1
                b = jax.random.uniform(keys[ki], (fout,), jnp.float32, -bound, bound)
                ki += 1
                layers.append((W, b))
            self.params[name] = layers

        self._build_fused()

        # v4/v5 VPU/EUP have no bf16 path -> keep tanh / elementwise math in f32
        # there; v6e/v7x run them in bf16 (matches the bf16 MXU operands anyway).
        kind = jax.devices()[0].device_kind.lower()
        self._bf16_elementwise_ok = not any(v in kind for v in ("v4", "v5"))

        self._fwd = jax.jit(self._forward_impl, static_argnames=("matmul_dtype",))

    def _build_fused(self):
        """Fuse the 3 branch MLPs into block-diagonal weights (one matmul per
        layer); layer 1 absorbs the param_idxs column gather as zero columns."""
        f_in = 2 * self.total_freqs + 1
        last = f_in - 1
        cols = [np.concatenate([idx, [last]]).astype(np.int64)
                for idx in self.param_idxs]

        def block_diag(mats):
            R = sum(m.shape[0] for m in mats)
            C = sum(m.shape[1] for m in mats)
            out = np.zeros((R, C), np.float32)
            r = c = 0
            for m in mats:
                out[r:r + m.shape[0], c:c + m.shape[1]] = m
                r += m.shape[0]
                c += m.shape[1]
            return out

        names = ('mu', 'sig', 'a')
        # Layer 1: scatter each branch's columns into the full w width.
        w1_parts, b1_parts = [], []
        for name, c in zip(names, cols):
            W, b = self.params[name][0]
            Wf = np.zeros((W.shape[0], f_in), np.float32)
            Wf[:, c] = np.asarray(W)
            w1_parts.append(Wf)
            b1_parts.append(np.asarray(b))
        self.W1 = jnp.asarray(np.concatenate(w1_parts, axis=0))
        self.b1 = jnp.asarray(np.concatenate(b1_parts)[:, None])
        # Layers 2 & 3: block-diagonal.
        self.W2 = jnp.asarray(block_diag([np.asarray(self.params[nm][1][0]) for nm in names]))
        self.b2 = jnp.asarray(np.concatenate([np.asarray(self.params[nm][1][1]) for nm in names])[:, None])
        self.W3 = jnp.asarray(block_diag([np.asarray(self.params[nm][2][0]) for nm in names]))
        self.b3 = jnp.asarray(np.concatenate([np.asarray(self.params[nm][2][1]) for nm in names])[:, None])

    def _forward_impl(self, w, data, matmul_dtype=jnp.bfloat16):
        w = jnp.asarray(w, jnp.float32)
        data = jnp.asarray(data, jnp.float32)
        T, f_in = w.shape
        x_dim = self.x_dim

        # Lane-tile selection: large tiles amortize per-step overhead; once T is
        # big, use >=2 blocks so v7x's two TensorCores both get work.
        if T <= 1024:
            tb = T
        else:
            n_blk = max(2, -(-T // 2048))            # ceil(T / 2048), at least 2
            tb = -(-T // (n_blk * 128)) * 128        # ceil(T / n_blk) up to 128-mult
        t_pad = -(-T // tb) * tb
        if t_pad != T:
            # Fused under jit; padded lanes are masked in-kernel and sliced off.
            w = jnp.pad(w, ((0, t_pad - T), (0, 0)))
            data = jnp.pad(data, ((0, t_pad - T), (0, 0)))

        w1 = self.W1.astype(matmul_dtype)
        w2 = self.W2.astype(matmul_dtype)
        w3 = self.W3.astype(matmul_dtype)
        b1, b2, b3 = self.b1, self.b2, self.b3

        if matmul_dtype != jnp.float32 and self._bf16_elementwise_ok:
            act_dtype = matmul_dtype
        else:
            act_dtype = jnp.float32
        approx_recip = matmul_dtype != jnp.float32

        kernel = functools.partial(_skew_nll_kernel, x_dim, T, matmul_dtype,
                                   act_dtype, approx_recip)

        def full(a):
            return pl.BlockSpec(a.shape, lambda i: (0, 0))

        out = pl.pallas_call(
            kernel,
            out_shape=jax.ShapeDtypeStruct((1, t_pad), jnp.float32),
            grid=(t_pad // tb,),
            in_specs=[pl.BlockSpec((tb, f_in), lambda i: (i, 0)),
                      pl.BlockSpec((tb, x_dim), lambda i: (i, 0)),
                      full(w1), full(b1), full(w2), full(b2), full(w3), full(b3)],
            out_specs=pl.BlockSpec((1, tb), lambda i: (0, i)),
            scratch_shapes=[pltpu.VMEM((x_dim, tb), jnp.float32)],
            compiler_params=pltpu.CompilerParams(
                dimension_semantics=("parallel",)),
        )(w, data, w1, b1, w2, b2, w3, b3)
        return out[0, :T]

    def forward(self, w, data, training_mask=None, matmul_dtype=jnp.bfloat16):
        # training_mask only gates gradient flow (detach); forward values identical.
        del training_mask
        return self._fwd(w, data, matmul_dtype=matmul_dtype)


def reference_forward(model, w, data):
    # Pure-JAX replica of the torch forward (per-branch, un-fused, full f32).
    from jax.scipy.special import erf
    hp = lax.Precision.HIGHEST
    w = w.astype(jnp.float32)
    data = data.astype(jnp.float32)
    last = w.shape[-1] - 1
    cols = [list(idx) + [last] for idx in model.param_idxs]

    def branch(c, layers):
        x = w[:, c]
        h = jnp.tanh(jnp.dot(x, layers[0][0].T, precision=hp) + layers[0][1])
        h = jnp.tanh(jnp.dot(h, layers[1][0].T, precision=hp) + layers[1][1])
        return jnp.dot(h, layers[2][0].T, precision=hp) + layers[2][1]

    mu = branch(cols[0], model.params['mu'])
    sig = 10.0 * jax.nn.softplus(branch(cols[1], model.params['sig']))
    alpha = branch(cols[2], model.params['a'])
    diff = data - mu
    z = alpha * diff / sig
    exact = jnp.log(0.5 * (1.0 + erf(z / np.sqrt(2.0))))
    approx = jnp.where(
        z < -0.1,
        -0.5 * z ** 2 - 4.8 + 2509.0 * (z - 13.0) / ((z - 40.0) ** 2 * (z - 5.0)),
        -jnp.exp(-2.0 * z) / 2.0 - jnp.exp(-(z - 0.2) ** 2) * 0.2,
    )
    logcdf = jnp.where(jnp.any(z < -7.0), approx, exact)
    losses = diff ** 2 / (2.0 * sig ** 2) + jnp.log(sig) - logcdf
    return jnp.mean(losses, axis=-1)


if __name__ == "__main__":
    key = jax.random.PRNGKey(0)
    k_params, k_w, k_data, k_w2, k_d2 = jax.random.split(key, 5)

    x_dim = 16
    num_freqs = [3, 3, 2]     # [num_mu, num_sig, num_alpha]
    n = 32
    total_freqs = sum(num_freqs)
    f_in = 2 * total_freqs + 1

    model = GEFComSkewNLL(x_dim, num_freqs, n, k_params)

    # --- small single-tile case (T=8) ---------------------------------------
    T = 8
    w = jax.random.normal(k_w, (T, f_in), jnp.float32)
    data = jax.random.normal(k_data, (T, x_dim), jnp.float32)
    ref = reference_forward(model, w, data)

    out_f32 = jax.block_until_ready(model.forward(w, data, matmul_dtype=jnp.float32))
    np.testing.assert_allclose(np.asarray(out_f32), np.asarray(ref), rtol=2e-3, atol=2e-3)

    out_bf16 = jax.block_until_ready(model.forward(w, data, matmul_dtype=jnp.bfloat16))
    np.testing.assert_allclose(np.asarray(out_bf16), np.asarray(ref), rtol=5e-2, atol=5e-2)

    # --- multi-tile case (T=1300 -> 2 lane tiles of 768, with padded tail) ---
    T2 = 1300
    w2 = jax.random.normal(k_w2, (T2, f_in), jnp.float32)
    data2 = jax.random.normal(k_d2, (T2, x_dim), jnp.float32)
    ref2 = reference_forward(model, w2, data2)
    out2 = jax.block_until_ready(model.forward(w2, data2, matmul_dtype=jnp.float32))
    np.testing.assert_allclose(np.asarray(out2), np.asarray(ref2), rtol=2e-3, atol=2e-3)

    print("KERNEL_OK")
</pallas_src>

<mosaic_0001>
module attributes {stable_mosaic.version = 11 : i64} {
  func.func @_skew_nll_kernel(%arg0: i32, %arg1: memref<8x17xf32, #tpu.memory_space<vmem>>, %arg2: memref<8x16xf32, #tpu.memory_space<vmem>>, %arg3: memref<96x17xf32, #tpu.memory_space<vmem>>, %arg4: memref<96x1xf32, #tpu.memory_space<vmem>>, %arg5: memref<160x96xf32, #tpu.memory_space<vmem>>, %arg6: memref<160x1xf32, #tpu.memory_space<vmem>>, %arg7: memref<48x160xf32, #tpu.memory_space<vmem>>, %arg8: memref<48x1xf32, #tpu.memory_space<vmem>>, %arg9: memref<1x8xf32, #tpu.memory_space<vmem>>, %arg10: memref<16x8xf32, #tpu.memory_space<vmem>>) attributes {dimension_semantics = [#tpu.dimension_semantics<parallel>], iteration_bounds = array<i64: 1>, scalar_prefetch = 0 : i64, scratch_operands = 1 : i64, tpu.core_type = #tpu.core_type<tc>, window_params = [{transform_indices = @transform_0, window_bounds = array<i64: 8, 17>}, {transform_indices = @transform_1, window_bounds = array<i64: 8, 16>}, {pipeline_mode = #tpu.pipeline_mode<synchronous>, transform_indices = @transform_2, window_bounds = array<i64: 96, 17>}, {pipeline_mode = #tpu.pipeline_mode<synchronous>, transform_indices = @transform_3, window_bounds = array<i64: 96, 1>}, {pipeline_mode = #tpu.pipeline_mode<synchronous>, transform_indices = @transform_4, window_bounds = array<i64: 160, 96>}, {pipeline_mode = #tpu.pipeline_mode<synchronous>, transform_indices = @transform_5, window_bounds = array<i64: 160, 1>}, {pipeline_mode = #tpu.pipeline_mode<synchronous>, transform_indices = @transform_6, window_bounds = array<i64: 48, 160>}, {pipeline_mode = #tpu.pipeline_mode<synchronous>, transform_indices = @transform_7, window_bounds = array<i64: 48, 1>}, {transform_indices = @transform_8, window_bounds = array<i64: 1, 8>}]} {
    %c0 = arith.constant 0 : index
    %c0_0 = arith.constant 0 : index
    %0 = vector.load %arg1[%c0, %c0_0] : memref<8x17xf32, #tpu.memory_space<vmem>>, vector<8x17xf32>
    %c0_1 = arith.constant 0 : index
    %c0_2 = arith.constant 0 : index
    %1 = vector.load %arg3[%c0_1, %c0_2] : memref<96x17xf32, #tpu.memory_space<vmem>>, vector<96x17xf32>
    %cst = arith.constant dense<0.000000e+00> : vector<96x8xf32>
    %2 = tpu.matmul %1, %0, %cst {dimension_numbers = #tpu.dot_dimension_numbers<[1], [1], [0], [0], [0, 0, 1, 0], [], []>} : vector<96x17xf32>, vector<8x17xf32>, vector<96x8xf32> -> vector<96x8xf32>
    %c0_3 = arith.constant 0 : index
    %c0_4 = arith.constant 0 : index
    %3 = vector.load %arg4[%c0_3, %c0_4] : memref<96x1xf32, #tpu.memory_space<vmem>>, vector<96x1xf32>
    %4 = vector.broadcast %3 : vector<96x1xf32> to vector<96x8xf32>
    %5 = arith.addf %2, %4 : vector<96x8xf32>
    %6 = math.tanh %5 : vector<96x8xf32>
    %c0_5 = arith.constant 0 : index
    %c0_6 = arith.constant 0 : index
    %7 = vector.load %arg5[%c0_5, %c0_6] : memref<160x96xf32, #tpu.memory_space<vmem>>, vector<160x96xf32>
    %cst_7 = arith.constant dense<0.000000e+00> : vector<160x8xf32>
    %8 = tpu.matmul %7, %6, %cst_7 {dimension_numbers = #tpu.dot_dimension_numbers<[1], [0], [0], [1], [0, 0, 1, 1], [], []>} : vector<160x96xf32>, vector<96x8xf32>, vector<160x8xf32> -> vector<160x8xf32>
    %c0_8 = arith.constant 0 : index
    %c0_9 = arith.constant 0 : index
    %9 = vector.load %arg6[%c0_8, %c0_9] : memref<160x1xf32, #tpu.memory_space<vmem>>, vector<160x1xf32>
    %10 = vector.broadcast %9 : vector<160x1xf32> to vector<160x8xf32>
    %11 = arith.addf %8, %10 : vector<160x8xf32>
    %12 = math.tanh %11 : vector<160x8xf32>
    %c0_10 = arith.constant 0 : index
    %c0_11 = arith.constant 0 : index
    %13 = vector.load %arg7[%c0_10, %c0_11] : memref<48x160xf32, #tpu.memory_space<vmem>>, vector<48x160xf32>
    %cst_12 = arith.constant dense<0.000000e+00> : vector<48x8xf32>
    %14 = tpu.matmul %13, %12, %cst_12 {dimension_numbers = #tpu.dot_dimension_numbers<[1], [0], [0], [1], [0, 0, 1, 1], [], []>} : vector<48x160xf32>, vector<160x8xf32>, vector<48x8xf32> -> vector<48x8xf32>
    %c0_13 = arith.constant 0 : index
    %c0_14 = arith.constant 0 : index
    %15 = vector.load %arg8[%c0_13, %c0_14] : memref<48x1xf32, #tpu.memory_space<vmem>>, vector<48x1xf32>
    %16 = vector.broadcast %15 : vector<48x1xf32> to vector<48x8xf32>
    %17 = arith.addf %14, %16 : vector<48x8xf32>
    %18 = vector.extract_strided_slice %17 {offsets = [0, 0], sizes = [16, 8], strides = [1, 1]} : vector<48x8xf32> to vector<16x8xf32>
    %19 = vector.extract_strided_slice %17 {offsets = [16, 0], sizes = [16, 8], strides = [1, 1]} : vector<48x8xf32> to vector<16x8xf32>
    %cst_15 = arith.constant 0.000000e+00 : f32
    %20 = vector.broadcast %cst_15 : f32 to vector<16x8xf32>
    %21 = arith.maximumf %19, %20 : vector<16x8xf32>
    %22 = math.absf %19 : vector<16x8xf32>
    %cst_16 = arith.constant 0.000000e+00 : f32
    %23 = vector.broadcast %cst_16 : f32 to vector<16x8xf32>
    %24 = arith.subf %23, %22 : vector<16x8xf32>
    %25 = math.exp %24 : vector<16x8xf32>
    %cst_17 = arith.constant 1.000000e+00 : f32
    %26 = vector.broadcast %cst_17 : f32 to vector<16x8xf32>
    %27 = arith.addf %26, %25 : vector<16x8xf32>
    %28 = math.log %27 : vector<16x8xf32>
    %29 = arith.addf %21, %28 : vector<16x8xf32>
    %cst_18 = arith.constant 1.000000e+01 : f32
    %30 = vector.broadcast %cst_18 : f32 to vector<16x8xf32>
    %31 = arith.mulf %30, %29 : vector<16x8xf32>
    %32 = vector.extract_strided_slice %17 {offsets = [32, 0], sizes = [16, 8], strides = [1, 1]} : vector<48x8xf32> to vector<16x8xf32>
    %33 = tpu.iota {dimensions = array<i32: 0>} : vector<16x16xi32>
    %34 = tpu.iota {dimensions = array<i32: 1>} : vector<16x16xi32>
    %35 = arith.cmpi eq, %33, %34 : vector<16x16xi32>
    %36 = arith.extui %35 : vector<16x16xi1> to vector<16x16xi32>
    %37 = arith.sitofp %36 : vector<16x16xi32> to vector<16x16xf32>
    %c0_19 = arith.constant 0 : index
    %c0_20 = arith.constant 0 : index
    %38 = vector.load %arg2[%c0_19, %c0_20] : memref<8x16xf32, #tpu.memory_space<vmem>>, vector<8x16xf32>
    %cst_21 = arith.constant dense<0.000000e+00> : vector<16x8xf32>
    %39 = tpu.matmul %37, %38, %cst_21 {dimension_numbers = #tpu.dot_dimension_numbers<[1], [1], [0], [0], [0, 0, 1, 0], [], []>} : vector<16x16xf32>, vector<8x16xf32>, vector<16x8xf32> -> vector<16x8xf32>
    %40 = arith.subf %39, %18 : vector<16x8xf32>
    %41 = tpu.reciprocal %31 : vector<16x8xf32> -> vector<16x8xf32>
    %42 = arith.mulf %40, %41 : vector<16x8xf32>
    %43 = arith.mulf %32, %42 : vector<16x8xf32>
    %44 = tpu.iota {dimensions = array<i32: 1>} : vector<1x8xi32>
    %c8_i32 = arith.constant 8 : i32
    %45 = arith.muli %arg0, %c8_i32 : i32
    %46 = vector.broadcast %45 : i32 to vector<1x8xi32>
    %47 = arith.addi %44, %46 : vector<1x8xi32>
    %c8_i32_22 = arith.constant 8 : i32
    %48 = vector.broadcast %c8_i32_22 : i32 to vector<1x8xi32>
    %49 = arith.cmpi slt, %47, %48 : vector<1x8xi32>
    %cst_23 = arith.constant 0.000000e+00 : f32
    %50 = vector.shape_cast %49 : vector<1x8xi1> to vector<1x8xi1>
    %51 = vector.broadcast %50 : vector<1x8xi1> to vector<16x8xi1>
    %52 = vector.broadcast %cst_23 : f32 to vector<16x8xf32>
    %53 = arith.select %51, %43, %52 : vector<16x8xi1>, vector<16x8xf32>
    %54 = vector.shape_cast %53 : vector<16x8xf32> to vector<1x16x8xf32>
    %cst_24 = arith.constant dense<0x7F800000> : vector<1xf32>
    %55 = vector.multi_reduction <minimumf>, %54, %cst_24 [1, 2] : vector<1x16x8xf32> to vector<1xf32>
    %56 = vector.shape_cast %55 : vector<1xf32> to vector<1x1x1xf32>
    %57 = vector.extract %56[0, 0, 0] : f32 from vector<1x1x1xf32>
    %cst_25 = arith.constant -7.000000e+00 : f32
    %58 = arith.cmpf olt, %57, %cst_25 : f32
    %59 = arith.extui %58 : i1 to i32
    %c0_i32 = arith.constant 0 : i32
    %60 = arith.cmpi ne, %59, %c0_i32 : i32
    scf.if %60 {
      %cst_34 = arith.constant -1.000000e-01 : f32
      %76 = vector.broadcast %cst_34 : f32 to vector<16x8xf32>
      %77 = arith.cmpf olt, %43, %76 : vector<16x8xf32>
      %cst_35 = arith.constant -5.000000e-01 : f32
      %78 = vector.broadcast %cst_35 : f32 to vector<16x8xf32>
      %79 = arith.mulf %78, %43 : vector<16x8xf32>
      %80 = arith.mulf %79, %43 : vector<16x8xf32>
      %cst_36 = arith.constant 4.800000e+00 : f32
      %81 = vector.broadcast %cst_36 : f32 to vector<16x8xf32>
      %82 = arith.subf %80, %81 : vector<16x8xf32>
      %cst_37 = arith.constant 1.300000e+01 : f32
      %83 = vector.broadcast %cst_37 : f32 to vector<16x8xf32>
      %84 = arith.subf %43, %83 : vector<16x8xf32>
      %cst_38 = arith.constant 2.509000e+03 : f32
      %85 = vector.broadcast %cst_38 : f32 to vector<16x8xf32>
      %86 = arith.mulf %85, %84 : vector<16x8xf32>
      %cst_39 = arith.constant 4.000000e+01 : f32
      %87 = vector.broadcast %cst_39 : f32 to vector<16x8xf32>
      %88 = arith.subf %43, %87 : vector<16x8xf32>
      %89 = arith.mulf %88, %88 : vector<16x8xf32>
      %cst_40 = arith.constant 5.000000e+00 : f32
      %90 = vector.broadcast %cst_40 : f32 to vector<16x8xf32>
      %91 = arith.subf %43, %90 : vector<16x8xf32>
      %92 = arith.mulf %89, %91 : vector<16x8xf32>
      %93 = arith.divf %86, %92 : vector<16x8xf32>
      %94 = arith.addf %82, %93 : vector<16x8xf32>
      %cst_41 = arith.constant -2.000000e+00 : f32
      %95 = vector.broadcast %cst_41 : f32 to vector<16x8xf32>
      %96 = arith.mulf %95, %43 : vector<16x8xf32>
      %97 = math.exp %96 : vector<16x8xf32>
      %cst_42 = arith.constant 0.000000e+00 : f32
      %98 = vector.broadcast %cst_42 : f32 to vector<16x8xf32>
      %99 = arith.subf %98, %97 : vector<16x8xf32>
      %cst_43 = arith.constant 5.000000e-01 : f32
      %100 = vector.broadcast %cst_43 : f32 to vector<16x8xf32>
      %101 = arith.mulf %99, %100 : vector<16x8xf32>
      %cst_44 = arith.constant 2.000000e-01 : f32
      %102 = vector.broadcast %cst_44 : f32 to vector<16x8xf32>
      %103 = arith.subf %43, %102 : vector<16x8xf32>
      %104 = arith.mulf %103, %103 : vector<16x8xf32>
      %cst_45 = arith.constant 0.000000e+00 : f32
      %105 = vector.broadcast %cst_45 : f32 to vector<16x8xf32>
      %106 = arith.subf %105, %104 : vector<16x8xf32>
      %107 = math.exp %106 : vector<16x8xf32>
      %cst_46 = arith.constant 2.000000e-01 : f32
      %108 = vector.broadcast %cst_46 : f32 to vector<16x8xf32>
      %109 = arith.mulf %107, %108 : vector<16x8xf32>
      %110 = arith.subf %101, %109 : vector<16x8xf32>
      %111 = arith.select %77, %94, %110 : vector<16x8xi1>, vector<16x8xf32>
      %c0_47 = arith.constant 0 : index
      %c0_48 = arith.constant 0 : index
      %112 = vector.load %arg10[%c0_47, %c0_48] : memref<16x8xf32, #tpu.memory_space<vmem>>, vector<16x8xf32>
      tpu.vector_store %arg10[%c0_47, %c0_48], %111 {strides = array<i32>} : memref<16x8xf32, #tpu.memory_space<vmem>>, vector<16x8xf32>,
    } else {
    }
    %true = arith.constant true
    %61 = arith.xori %58, %true : i1
    %62 = arith.extui %61 : i1 to i32
    %c0_i32_26 = arith.constant 0 : i32
    %63 = arith.cmpi ne, %62, %c0_i32_26 : i32
    scf.if %63 {
      %76 = math.absf %43 : vector<16x8xf32>
      %cst_34 = arith.constant 0.707106769 : f32
      %77 = vector.broadcast %cst_34 : f32 to vector<16x8xf32>
      %78 = arith.mulf %76, %77 : vector<16x8xf32>
      %cst_35 = arith.constant 0.327591091 : f32
      %79 = vector.broadcast %cst_35 : f32 to vector<16x8xf32>
      %80 = arith.mulf %79, %78 : vector<16x8xf32>
      %cst_36 = arith.constant 1.000000e+00 : f32
      %81 = vector.broadcast %cst_36 : f32 to vector<16x8xf32>
      %82 = arith.addf %81, %80 : vector<16x8xf32>
      %cst_37 = arith.constant 1.000000e+00 : f32
      %83 = vector.broadcast %cst_37 : f32 to vector<16x8xf32>
      %84 = arith.divf %83, %82 : vector<16x8xf32>
      %cst_38 = arith.constant 1.06140542 : f32
      %85 = vector.broadcast %cst_38 : f32 to vector<16x8xf32>
      %86 = arith.mulf %84, %85 : vector<16x8xf32>
      %cst_39 = arith.constant -1.45315206 : f32
      %87 = vector.broadcast %cst_39 : f32 to vector<16x8xf32>
      %88 = arith.addf %87, %86 : vector<16x8xf32>
      %89 = arith.mulf %84, %88 : vector<16x8xf32>
      %cst_40 = arith.constant 1.42141378 : f32
      %90 = vector.broadcast %cst_40 : f32 to vector<16x8xf32>
      %91 = arith.addf %90, %89 : vector<16x8xf32>
      %92 = arith.mulf %84, %91 : vector<16x8xf32>
      %cst_41 = arith.constant -0.284496725 : f32
      %93 = vector.broadcast %cst_41 : f32 to vector<16x8xf32>
      %94 = arith.addf %93, %92 : vector<16x8xf32>
      %95 = arith.mulf %84, %94 : vector<16x8xf32>
      %cst_42 = arith.constant 0.254829586 : f32
      %96 = vector.broadcast %cst_42 : f32 to vector<16x8xf32>
      %97 = arith.addf %96, %95 : vector<16x8xf32>
      %98 = arith.mulf %84, %97 : vector<16x8xf32>
      %cst_43 = arith.constant 5.000000e-01 : f32
      %99 = vector.broadcast %cst_43 : f32 to vector<16x8xf32>
      %100 = arith.mulf %99, %98 : vector<16x8xf32>
      %101 = math.log %100 : vector<16x8xf32>
      %102 = arith.mulf %78, %78 : vector<16x8xf32>
      %103 = arith.subf %101, %102 : vector<16x8xf32>
      %cst_44 = arith.constant 5.000000e-01 : f32
      %104 = vector.broadcast %cst_44 : f32 to vector<16x8xf32>
      %105 = arith.mulf %104, %98 : vector<16x8xf32>
      %cst_45 = arith.constant 0.000000e+00 : f32
      %106 = vector.broadcast %cst_45 : f32 to vector<16x8xf32>
      %107 = arith.subf %106, %78 : vector<16x8xf32>
      %108 = arith.mulf %107, %78 : vector<16x8xf32>
      %109 = math.exp %108 : vector<16x8xf32>
      %110 = arith.mulf %105, %109 : vector<16x8xf32>
      %cst_46 = arith.constant 1.000000e+00 : f32
      %111 = vector.broadcast %cst_46 : f32 to vector<16x8xf32>
      %112 = arith.subf %111, %110 : vector<16x8xf32>
      %113 = math.log %112 : vector<16x8xf32>
      %cst_47 = arith.constant 0.000000e+00 : f32
      %114 = vector.broadcast %cst_47 : f32 to vector<16x8xf32>
      %115 = arith.cmpf ole, %43, %114 : vector<16x8xf32>
      %116 = arith.select %115, %103, %113 : vector<16x8xi1>, vector<16x8xf32>
      %c0_48 = arith.constant 0 : index
      %c0_49 = arith.constant 0 : index
      %117 = vector.load %arg10[%c0_48, %c0_49] : memref<16x8xf32, #tpu.memory_space<vmem>>, vector<16x8xf32>
      tpu.vector_store %arg10[%c0_48, %c0_49], %116 {strides = array<i32>} : memref<16x8xf32, #tpu.memory_space<vmem>>, vector<16x8xf32>,
    } else {
    }
    %cst_27 = arith.constant 5.000000e-01 : f32
    %64 = vector.broadcast %cst_27 : f32 to vector<16x8xf32>
    %65 = arith.mulf %64, %42 : vector<16x8xf32>
    %66 = arith.mulf %65, %42 : vector<16x8xf32>
    %67 = math.log %31 : vector<16x8xf32>
    %68 = arith.addf %66, %67 : vector<16x8xf32>
    %c0_28 = arith.constant 0 : index
    %c0_29 = arith.constant 0 : index
    %69 = vector.load %arg10[%c0_28, %c0_29] : memref<16x8xf32, #tpu.memory_space<vmem>>, vector<16x8xf32>
    %70 = arith.subf %68, %69 : vector<16x8xf32>
    %cst_30 = arith.constant dense<0.000000e+00> : vector<8xf32>
    %71 = vector.multi_reduction <add>, %70, %cst_30 [0] : vector<16x8xf32> to vector<8xf32>
    %72 = vector.shape_cast %71 : vector<8xf32> to vector<1x8xf32>
    %cst_31 = arith.constant 1.600000e+01 : f32
    %73 = vector.broadcast %cst_31 : f32 to vector<1x8xf32>
    %74 = arith.divf %72, %73 : vector<1x8xf32>
    %c0_32 = arith.constant 0 : index
    %c0_33 = arith.constant 0 : index
    %75 = vector.load %arg9[%c0_32, %c0_33] : memref<1x8xf32, #tpu.memory_space<vmem>>, vector<1x8xf32>
    tpu.vector_store %arg9[%c0_32, %c0_33], %74 {strides = array<i32>} : memref<1x8xf32, #tpu.memory_space<vmem>>, vector<1x8xf32>,
    return
  }
  func.func @transform_0(%arg0: i32) -> (i32, i32) {
    %c0_i32 = arith.constant 0 : i32
    %c0_i32_0 = arith.constant 0 : i32
    return %arg0, %c0_i32 : i32, i32
  }
  func.func @transform_1(%arg0: i32) -> (i32, i32) {
    %c0_i32 = arith.constant 0 : i32
    %c0_i32_0 = arith.constant 0 : i32
    return %arg0, %c0_i32 : i32, i32
  }
  func.func @transform_2(%arg0: i32) -> (i32, i32) {
    %c0_i32 = arith.constant 0 : i32
    %c0_i32_0 = arith.constant 0 : i32
    %c0_i32_1 = arith.constant 0 : i32
    return %c0_i32, %c0_i32_0 : i32, i32
  }
  func.func @transform_3(%arg0: i32) -> (i32, i32) {
    %c0_i32 = arith.constant 0 : i32
    %c0_i32_0 = arith.constant 0 : i32
    %c0_i32_1 = arith.constant 0 : i32
    return %c0_i32, %c0_i32_0 : i32, i32
  }
  func.func @transform_4(%arg0: i32) -> (i32, i32) {
    %c0_i32 = arith.constant 0 : i32
    %c0_i32_0 = arith.constant 0 : i32
    %c0_i32_1 = arith.constant 0 : i32
    return %c0_i32, %c0_i32_0 : i32, i32
  }
  func.func @transform_5(%arg0: i32) -> (i32, i32) {
    %c0_i32 = arith.constant 0 : i32
    %c0_i32_0 = arith.constant 0 : i32
    %c0_i32_1 = arith.constant 0 : i32
    return %c0_i32, %c0_i32_0 : i32, i32
  }
  func.func @transform_6(%arg0: i32) -> (i32, i32) {
    %c0_i32 = arith.constant 0 : i32
    %c0_i32_0 = arith.constant 0 : i32
    %c0_i32_1 = arith.constant 0 : i32
    return %c0_i32, %c0_i32_0 : i32, i32
  }
  func.func @transform_7(%arg0: i32) -> (i32, i32) {
    %c0_i32 = arith.constant 0 : i32
    %c0_i32_0 = arith.constant 0 : i32
    %c0_i32_1 = arith.constant 0 : i32
    return %c0_i32, %c0_i32_0 : i32, i32
  }
  func.func @transform_8(%arg0: i32) -> (i32, i32) {
    %c0_i32 = arith.constant 0 : i32
    %c0_i32_0 = arith.constant 0 : i32
    return %c0_i32, %arg0 : i32, i32
  }
}

</mosaic_0001>

<llo_original>
// kernel: _forward_impl.1
$region0: #{_forward_impl.1}
  #allocation0 [shape = 'u32[]', space=smem, size = 0x4, offset = 0x4, fixed_abs, tag = 'smem constant byte address 0x4 - core index']
  #allocation1 [shape = 'u32[72,128]{1,0:T(1,128)}', space=vmem, size = 0x9000, scoped, tag = 'internal scratch']
  #allocation2 [shape = 'f32[16,8]{1,0:T(8,128)}', space=vmem, size = 0x2000, scoped, tag = 'scratch operand']
  %s0 = inlined_call_operand.hbm [shape: f32[8,17], index: 0, kind: input, shape index: {}]
  %s1 = inlined_call_operand.hbm [shape: f32[8,16], index: 1, kind: input, shape index: {}]
  %s2 = inlined_call_operand.hbm [shape: f32[96,17], index: 2, kind: input, shape index: {}]
  %s3 = inlined_call_operand.hbm [shape: f32[96,1], index: 3, kind: input, shape index: {}]
  %s4 = inlined_call_operand.hbm [shape: f32[160,96], index: 4, kind: input, shape index: {}]
  %s5 = inlined_call_operand.hbm [shape: f32[160,1], index: 5, kind: input, shape index: {}]
  %s6 = inlined_call_operand.hbm [shape: f32[48,160], index: 6, kind: input, shape index: {}]
  %s7 = inlined_call_operand.hbm [shape: f32[48,1], index: 7, kind: input, shape index: {}]
  %s8 = inlined_call_operand.hbm [shape: f32[1,8], index: 8, kind: output, shape index: {}]
  %s9 = sld [smem:[#allocation0]]
  $region82: #{_forward_impl.1} parent=0
    _
  %s11 = ssub.s32 1, %s9
  %s12 = scalar_select 0, %s11, %s9
  $region1: #{_forward_impl.1} parent=0
    #allocation3 [shape = 'u8[4096]{0}', space=vmem, size = 0x1000, scoped, tag = 'input window, operand 0, single buffered']
    #allocation4 [shape = 's32[1]{0}', space=sflag, size = 0x4, scoped, tag = 'scoped memory for _forward_impl.1']
    #allocation5 [shape = 's32[1]{0}', space=sflag, size = 0x4, scoped, tag = 'scoped memory for _forward_impl.1']
    #allocation6 [shape = 'u8[4096]{0}', space=vmem, size = 0x1000, scoped, tag = 'input window, operand 1, single buffered']
    #allocation7 [shape = 's32[1]{0}', space=sflag, size = 0x4, scoped, tag = 'scoped memory for _forward_impl.1']
    #allocation8 [shape = 'u8[49152]{0}', space=vmem, size = 0xc000, scoped, tag = 'input window, operand 2, single buffered']
    #allocation9 [shape = 'u8[49152]{0}', space=vmem, size = 0xc000, scoped, tag = 'input window, operand 3, single buffered']
    #allocation10 [shape = 's32[1]{0}', space=sflag, size = 0x4, scoped, tag = 'scoped memory for _forward_impl.1']
    #allocation11 [shape = 'u8[81920]{0}', space=vmem, size = 0x14000, scoped, tag = 'input window, operand 4, single buffered']
    #allocation12 [shape = 'u8[81920]{0}', space=vmem, size = 0x14000, scoped, tag = 'input window, operand 5, single buffered']
    #allocation13 [shape = 's32[1]{0}', space=sflag, size = 0x4, scoped, tag = 'scoped memory for _forward_impl.1']
    #allocation14 [shape = 'u8[49152]{0}', space=vmem, size = 0xc000, scoped, tag = 'input window, operand 6, single buffered']
    #allocation15 [shape = 'u8[24576]{0}', space=vmem, size = 0x6000, scoped, tag = 'input window, operand 7, single buffered']
    #allocation16 [shape = 's32[1]{0}', space=sflag, size = 0x4, scoped, tag = 'scoped memory for _forward_impl.1']
    #allocation17 [shape = 'u8[512]{0}', space=vmem, size = 0x400, scoped, tag = 'output window, operand 0, single buffered']
    %13 = vsyncpa [#allocation4], 0
    %14 = vsyncpa [#allocation7], 0
    %15 = vsyncpa [#allocation10], 0
    %16 = vsyncpa [#allocation13], 0
    %17 = vsyncpa [#allocation16], 0
    %18 = vsyncpa [#allocation5], 0
    // Predicated region
    $region2: #{_forward_impl.1} parent=1 // pred_check
      _
    $region3: #{_forward_impl.1} parent=1 // pred_check_branch
      %20 = sbr.rel (0) target = $region5
    $region4: #{_forward_impl.1} parent=1 // pred_region
      %22 = vsyncadd [#allocation4], 0
      %s24 = sshll.u32 %s0, 4
      %s25 = int_to_ptr.hbm [resolvable:$true] %s24
      %s26 = sshll.u32 [#allocation3], 4
      %s27 = int_to_ptr.vmem [resolvable:$true] %s26
      %29 = dma.hbm_to_vmem [thread:$0]  %s25, 128, %s27, [#allocation4]
    $region5: #{_forward_impl.1} parent=1 // pred_fallthru
      _
    // Predicated region
    $region6: #{_forward_impl.1} parent=1 // pred_check
      _
    $region7: #{_forward_impl.1} parent=1 // pred_check_branch
      %31 = sbr.rel (0) target = $region9
    $region8: #{_forward_impl.1} parent=1 // pred_region
      %33 = vsyncadd [#allocation7], 0
      %s35 = sshll.u32 %s1, 4
      %s36 = int_to_ptr.hbm [resolvable:$true] %s35
      %s37 = sshll.u32 [#allocation6], 4
      %s38 = int_to_ptr.vmem [resolvable:$true] %s37
      %40 = dma.hbm_to_vmem [thread:$0]  %s36, 128, %s38, [#allocation7]
    $region9: #{_forward_impl.1} parent=1 // pred_fallthru
      _
    // Predicated region
    $region10: #{_forward_impl.1} parent=1 // pred_check
      _
    $region11: #{_forward_impl.1} parent=1 // pred_check_branch
      %42 = sbr.rel (0) target = $region13
    $region12: #{_forward_impl.1} parent=1 // pred_region
      %44 = vsyncadd [#allocation7], 0
      %s45 = sshll.u32 %s2, 4
      %s46 = int_to_ptr.hbm [resolvable:$true] %s45
      %s47 = sshll.u32 [#allocation8], 4
      %s48 = int_to_ptr.vmem [resolvable:$true] %s47
      %53 = dma.hbm_to_vmem [thread:$0]  %s46, 1536, %s48, [#allocation7], 128, 128, 8
    $region13: #{_forward_impl.1} parent=1 // pred_fallthru
      _
    // Predicated region
    $region14: #{_forward_impl.1} parent=1 // pred_check
      _
    $region15: #{_forward_impl.1} parent=1 // pred_check_branch
      %55 = sbr.rel (0) target = $region17
    $region16: #{_forward_impl.1} parent=1 // pred_region
      %57 = vsyncadd [#allocation10], 0
      %s58 = sshll.u32 %s3, 4
      %s59 = int_to_ptr.hbm [resolvable:$true] %s58
      %s60 = sshll.u32 [#allocation9], 4
      %s61 = int_to_ptr.vmem [resolvable:$true] %s60
      %66 = dma.hbm_to_vmem [thread:$0]  %s59, 1536, %s61, [#allocation10], 128, 128, 8
    $region17: #{_forward_impl.1} parent=1 // pred_fallthru
      _
    // Predicated region
    $region18: #{_forward_impl.1} parent=1 // pred_check
      _
    $region19: #{_forward_impl.1} parent=1 // pred_check_branch
      %68 = sbr.rel (0) target = $region21
    $region20: #{_forward_impl.1} parent=1 // pred_region
      %70 = vsyncadd [#allocation10], 0
      %s71 = sshll.u32 %s4, 4
      %s72 = int_to_ptr.hbm [resolvable:$true] %s71
      %s73 = sshll.u32 [#allocation11], 4
      %s74 = int_to_ptr.vmem [resolvable:$true] %s73
      %79 = dma.hbm_to_vmem [thread:$0]  %s72, 2560, %s74, [#allocation10], 128, 128, 8
    $region21: #{_forward_impl.1} parent=1 // pred_fallthru
      _
    // Predicated region
    $region22: #{_forward_impl.1} parent=1 // pred_check
      _
    $region23: #{_forward_impl.1} parent=1 // pred_check_branch
      %81 = sbr.rel (0) target = $region25
    $region24: #{_forward_impl.1} parent=1 // pred_region
      %83 = vsyncadd [#allocation13], 0
      %s84 = sshll.u32 %s5, 4
      %s85 = int_to_ptr.hbm [resolvable:$true] %s84
      %s86 = sshll.u32 [#allocation12], 4
      %s87 = int_to_ptr.vmem [resolvable:$true] %s86
      %92 = dma.hbm_to_vmem [thread:$0]  %s85, 2560, %s87, [#allocation13], 128, 128, 8
    $region25: #{_forward_impl.1} parent=1 // pred_fallthru
      _
    // Predicated region
    $region26: #{_forward_impl.1} parent=1 // pred_check
      _
    $region27: #{_forward_impl.1} parent=1 // pred_check_branch
      %94 = sbr.rel (0) target = $region29
    $region28: #{_forward_impl.1} parent=1 // pred_region
      %96 = vsyncadd [#allocation13], 0
      %s97 = sshll.u32 %s6, 4
      %s98 = int_to_ptr.hbm [resolvable:$true] %s97
      %s99 = sshll.u32 [#allocation14], 4
      %s100 = int_to_ptr.vmem [resolvable:$true] %s99
      %105 = dma.hbm_to_vmem [thread:$0]  %s98, 1536, %s100, [#allocation13], 256, 256, 16
    $region29: #{_forward_impl.1} parent=1 // pred_fallthru
      _
    // Predicated region
    $region30: #{_forward_impl.1} parent=1 // pred_check
      _
    $region31: #{_forward_impl.1} parent=1 // pred_check_branch
      %107 = sbr.rel (0) target = $region33
    $region32: #{_forward_impl.1} parent=1 // pred_region
      %109 = vsyncadd [#allocation16], 0
      %s110 = sshll.u32 %s7, 4
      %s111 = int_to_ptr.hbm [resolvable:$true] %s110
      %s112 = sshll.u32 [#allocation15], 4
      %s113 = int_to_ptr.vmem [resolvable:$true] %s112
      %118 = dma.hbm_to_vmem [thread:$0]  %s111, 768, %s113, [#allocation16], 128, 128, 8
    $region33: #{_forward_impl.1} parent=1 // pred_fallthru
      _
    // Predicated region
    $region34: #{_forward_impl.1} parent=1 // pred_check
      _
    $region35: #{_forward_impl.1} parent=1 // pred_check_branch
      %120 = sbr.rel (0) target = $region37
    $region36: #{_forward_impl.1} parent=1 // pred_region
      %122 = dma.done [#allocation4], 128
    $region37: #{_forward_impl.1} parent=1 // pred_fallthru
      _
    // Predicated region
    $region38: #{_forward_impl.1} parent=1 // pred_check
      _
    $region39: #{_forward_impl.1} parent=1 // pred_check_branch
      %124 = sbr.rel (0) target = $region41
    $region40: #{_forward_impl.1} parent=1 // pred_region
      %126 = dma.done [#allocation7], 128
    $region41: #{_forward_impl.1} parent=1 // pred_fallthru
      _
    // Predicated region
    $region42: #{_forward_impl.1} parent=1 // pred_check
      _
    $region43: #{_forward_impl.1} parent=1 // pred_check_branch
      %128 = sbr.rel (0) target = $region45
    $region44: #{_forward_impl.1} parent=1 // pred_region
      %130 = dma.done [#allocation7], 1536
    $region45: #{_forward_impl.1} parent=1 // pred_fallthru
      _
    // Predicated region
    $region46: #{_forward_impl.1} parent=1 // pred_check
      _
    $region47: #{_forward_impl.1} parent=1 // pred_check_branch
      %132 = sbr.rel (0) target = $region49
    $region48: #{_forward_impl.1} parent=1 // pred_region
      %134 = dma.done [#allocation10], 1536
    $region49: #{_forward_impl.1} parent=1 // pred_fallthru
      _
    // Predicated region
    $region50: #{_forward_impl.1} parent=1 // pred_check
      _
    $region51: #{_forward_impl.1} parent=1 // pred_check_branch
      %136 = sbr.rel (0) target = $region53
    $region52: #{_forward_impl.1} parent=1 // pred_region
      %138 = dma.done [#allocation10], 2560
    $region53: #{_forward_impl.1} parent=1 // pred_fallthru
      _
    // Predicated region
    $region54: #{_forward_impl.1} parent=1 // pred_check
      _
    $region55: #{_forward_impl.1} parent=1 // pred_check_branch
      %140 = sbr.rel (0) target = $region57
    $region56: #{_forward_impl.1} parent=1 // pred_region
      %142 = dma.done [#allocation13], 2560
    $region57: #{_forward_impl.1} parent=1 // pred_fallthru
      _
    // Predicated region
    $region58: #{_forward_impl.1} parent=1 // pred_check
      _
    $region59: #{_forward_impl.1} parent=1 // pred_check_branch
      %144 = sbr.rel (0) target = $region61
    $region60: #{_forward_impl.1} parent=1 // pred_region
      %146 = dma.done [#allocation13], 1536
    $region61: #{_forward_impl.1} parent=1 // pred_fallthru
      _
    // Predicated region
    $region62: #{_forward_impl.1} parent=1 // pred_check
      _
    $region63: #{_forward_impl.1} parent=1 // pred_check_branch
      %148 = sbr.rel (0) target = $region65
    $region64: #{_forward_impl.1} parent=1 // pred_region
      %150 = dma.done [#allocation16], 768
    $region65: #{_forward_impl.1} parent=1 // pred_fallthru
      _
    %v151 = vld [vmem:[#allocation3] sm:$0xff]
    %v152 = vld [vmem:[#allocation8] sm:$0xff]
    %v153 = vld [vmem:[#allocation8 + $0x8] sm:$0xff]
    %v154 = vld [vmem:[#allocation8 + $0x10] sm:$0xff]
    %v155 = vld [vmem:[#allocation8 + $0x18] sm:$0xff]
    %v156 = vld [vmem:[#allocation8 + $0x20] sm:$0xff]
    %v157 = vld [vmem:[#allocation8 + $0x28] sm:$0xff]
    %v158 = vld [vmem:[#allocation8 + $0x30] sm:$0xff]
    %v159 = vld [vmem:[#allocation8 + $0x38] sm:$0xff]
    %v160 = vld [vmem:[#allocation8 + $0x40] sm:$0xff]
    %v161 = vld [vmem:[#allocation8 + $0x48] sm:$0xff]
    %v162 = vld [vmem:[#allocation8 + $0x50] sm:$0xff]
    %v163 = vld [vmem:[#allocation8 + $0x58] sm:$0xff]
    %v164 = vld [vmem:[#allocation9] sm:$0xff]
    %v165 = vld [vmem:[#allocation9 + $0x8] sm:$0xff]
    %v166 = vld [vmem:[#allocation9 + $0x10] sm:$0xff]
    %v167 = vld [vmem:[#allocation9 + $0x18] sm:$0xff]
    %v168 = vld [vmem:[#allocation9 + $0x20] sm:$0xff]
    %v169 = vld [vmem:[#allocation9 + $0x28] sm:$0xff]
    %v170 = vld [vmem:[#allocation9 + $0x30] sm:$0xff]
    %v171 = vld [vmem:[#allocation9 + $0x38] sm:$0xff]
    %v172 = vld [vmem:[#allocation9 + $0x40] sm:$0xff]
    %v173 = vld [vmem:[#allocation9 + $0x48] sm:$0xff]
    %v174 = vld [vmem:[#allocation9 + $0x50] sm:$0xff]
    %v175 = vld [vmem:[#allocation9 + $0x58] sm:$0xff]
    %177 = vset.pattern.permute.xlu0 0
    %178 = vperm.xlu0 %177, %v164
    %v179 = vpop.permute.xlu0 %178
    %182 = vset.pattern.permute.xlu0 0
    %183 = vperm.xlu0 %182, %v165
    %v184 = vpop.permute.xlu0 %183
    %187 = vset.pattern.permute.xlu0 0
    %188 = vperm.xlu0 %187, %v166
    %v189 = vpop.permute.xlu0 %188
    %192 = vset.pattern.permute.xlu0 0
    %193 = vperm.xlu0 %192, %v167
    %v194 = vpop.permute.xlu0 %193
    %197 = vset.pattern.permute.xlu0 0
    %198 = vperm.xlu0 %197, %v168
    %v199 = vpop.permute.xlu0 %198
    %202 = vset.pattern.permute.xlu0 0
    %203 = vperm.xlu0 %202, %v169
    %v204 = vpop.permute.xlu0 %203
    %207 = vset.pattern.permute.xlu0 0
    %208 = vperm.xlu0 %207, %v170
    %v209 = vpop.permute.xlu0 %208
    %212 = vset.pattern.permute.xlu0 0
    %213 = vperm.xlu0 %212, %v171
    %v214 = vpop.permute.xlu0 %213
    %217 = vset.pattern.permute.xlu0 0
    %218 = vperm.xlu0 %217, %v172
    %v219 = vpop.permute.xlu0 %218
    %222 = vset.pattern.permute.xlu0 0
    %223 = vperm.xlu0 %222, %v173
    %v224 = vpop.permute.xlu0 %223
    %227 = vset.pattern.permute.xlu0 0
    %228 = vperm.xlu0 %227, %v174
    %v229 = vpop.permute.xlu0 %228
    %232 = vset.pattern.permute.xlu0 0
    %233 = vperm.xlu0 %232, %v175
    %v234 = vpop.permute.xlu0 %233
    %vm236 = vcmask 138240
    %v238 = vsel %vm236, %v152, 0
    %v241 = vsel %vm236, %v153, 0
    %v244 = vsel %vm236, %v154, 0
    %v247 = vsel %vm236, %v155, 0
    %v250 = vsel %vm236, %v156, 0
    %v253 = vsel %vm236, %v157, 0
    %v256 = vsel %vm236, %v158, 0
    %v259 = vsel %vm236, %v159, 0
    %v262 = vsel %vm236, %v160, 0
    %v265 = vsel %vm236, %v161, 0
    %v268 = vsel %vm236, %v162, 0
    %v271 = vsel %vm236, %v163, 0
    %v274 = vsel %vm236, %v151, 0
    %276 = vmatpush.xpose.msra.mxu0 0.0
    %277 = vmatpush.xpose.msra.mxu0 0.0
    %278 = vmatpush.xpose.msra.mxu0 0.0
    %279 = vmatpush.xpose.msra.mxu0 0.0
    %280 = vmatpush.xpose.msra.mxu0 0.0
    %281 = vmatpush.xpose.msra.mxu0 0.0
    %282 = vmatpush.xpose.msra.mxu0 0.0
    %283 = vmatpush.xpose.msra.mxu0 0.0
    %284 = vmatpush.xpose.msra.mxu0 0.0
    %285 = vmatpush.xpose.msra.mxu0 0.0
    %286 = vmatpush.xpose.msra.mxu0 0.0
    %287 = vmatpush.xpose.msra.mxu0 0.0
    %288 = vmatpush.xpose.msra.mxu0 0.0
    %289 = vmatpush.xpose.msra.mxu0 0.0
    %290 = vmatpush.xpose.msra.mxu0 0.0
    %291 = vmatpush.xpose.msra.mxu0 %v274
    %292 = vmatmul.f32.gmra.mxu0 %v238
    %v293 = vpop.f32.mrf.mxu0
    %v294 = vadd.f32 %v179, %v293
    %295 = vmatmul.f32.gmra.mxu0 %v241
    %v296 = vpop.f32.mrf.mxu0
    %v297 = vadd.f32 %v184, %v296
    %298 = vmatmul.f32.gmra.mxu0 %v244
    %v299 = vpop.f32.mrf.mxu0
    %v300 = vadd.f32 %v189, %v299
    %301 = vmatmul.f32.gmra.mxu0 %v247
    %v302 = vpop.f32.mrf.mxu0
    %v303 = vadd.f32 %v194, %v302
    %304 = vmatmul.f32.gmra.mxu0 %v250
    %v305 = vpop.f32.mrf.mxu0
    %v306 = vadd.f32 %v199, %v305
    %307 = vmatmul.f32.gmra.mxu0 %v253
    %v308 = vpop.f32.mrf.mxu0
    %v309 = vadd.f32 %v204, %v308
    %310 = vmatmul.f32.gmra.mxu0 %v256
    %v311 = vpop.f32.mrf.mxu0
    %v312 = vadd.f32 %v209, %v311
    %313 = vmatmul.f32.gmra.mxu0 %v259
    %v314 = vpop.f32.mrf.mxu0
    %v315 = vadd.f32 %v214, %v314
    %316 = vmatmul.f32.gmra.mxu0 %v262
    %v317 = vpop.f32.mrf.mxu0
    %v318 = vadd.f32 %v219, %v317
    %319 = vmatmul.f32.gmra.mxu0 %v265
    %v320 = vpop.f32.mrf.mxu0
    %v321 = vadd.f32 %v224, %v320
    %322 = vmatmul.f32.gmra.mxu0 %v268
    %v323 = vpop.f32.mrf.mxu0
    %v324 = vadd.f32 %v229, %v323
    %325 = vmatmul.f32.gmra.mxu0 %v271
    %v326 = vpop.f32.mrf.mxu0
    %v327 = vadd.f32 %v234, %v326
    %328 = vdwg.mxu0
    %v329 = vtanh.pop %v294
    %v330 = vtanh.pop %v297
    %v331 = vtanh.pop %v300
    %v332 = vtanh.pop %v303
    %v333 = vtanh.pop %v306
    %v334 = vtanh.pop %v309
    %v335 = vtanh.pop %v312
    %v336 = vtanh.pop %v315
    %v337 = vtanh.pop %v318
    %v338 = vtanh.pop %v321
    %v339 = vtanh.pop %v324
    %v340 = vtanh.pop %v327
    %v341 = vld [vmem:[#allocation11] sm:$0xff]
    %v342 = vld [vmem:[#allocation11 + $0x8] sm:$0xff]
    %v343 = vld [vmem:[#allocation11 + $0x10] sm:$0xff]
    %v344 = vld [vmem:[#allocation11 + $0x18] sm:$0xff]
    %v345 = vld [vmem:[#allocation11 + $0x20] sm:$0xff]
    %v346 = vld [vmem:[#allocation11 + $0x28] sm:$0xff]
    %v347 = vld [vmem:[#allocation11 + $0x30] sm:$0xff]
    %v348 = vld [vmem:[#allocation11 + $0x38] sm:$0xff]
    %v349 = vld [vmem:[#allocation11 + $0x40] sm:$0xff]
    %v350 = vld [vmem:[#allocation11 + $0x48] sm:$0xff]
    %v351 = vld [vmem:[#allocation11 + $0x50] sm:$0xff]
    %v352 = vld [vmem:[#allocation11 + $0x58] sm:$0xff]
    %v353 = vld [vmem:[#allocation11 + $0x60] sm:$0xff]
    %v354 = vld [vmem:[#allocation11 + $0x68] sm:$0xff]
    %v355 = vld [vmem:[#allocation11 + $0x70] sm:$0xff]
    %v356 = vld [vmem:[#allocation11 + $0x78] sm:$0xff]
    %v357 = vld [vmem:[#allocation11 + $0x80] sm:$0xff]
    %v358 = vld [vmem:[#allocation11 + $0x88] sm:$0xff]
    %v359 = vld [vmem:[#allocation11 + $0x90] sm:$0xff]
    %v360 = vld [vmem:[#allocation11 + $0x98] sm:$0xff]
    %v361 = vld [vmem:[#allocation12] sm:$0xff]
    %v362 = vld [vmem:[#allocation12 + $0x8] sm:$0xff]
    %v363 = vld [vmem:[#allocation12 + $0x10] sm:$0xff]
    %v364 = vld [vmem:[#allocation12 + $0x18] sm:$0xff]
    %v365 = vld [vmem:[#allocation12 + $0x20] sm:$0xff]
    %v366 = vld [vmem:[#allocation12 + $0x28] sm:$0xff]
    %v367 = vld [vmem:[#allocation12 + $0x30] sm:$0xff]
    %v368 = vld [vmem:[#allocation12 + $0x38] sm:$0xff]
    %v369 = vld [vmem:[#allocation12 + $0x40] sm:$0xff]
    %v370 = vld [vmem:[#allocation12 + $0x48] sm:$0xff]
    %v371 = vld [vmem:[#allocation12 + $0x50] sm:$0xff]
    %v372 = vld [vmem:[#allocation12 + $0x58] sm:$0xff]
    %v373 = vld [vmem:[#allocation12 + $0x60] sm:$0xff]
    %v374 = vld [vmem:[#allocation12 + $0x68] sm:$0xff]
    %v375 = vld [vmem:[#allocation12 + $0x70] sm:$0xff]
    %v376 = vld [vmem:[#allocation12 + $0x78] sm:$0xff]
    %v377 = vld [vmem:[#allocation12 + $0x80] sm:$0xff]
    %v378 = vld [vmem:[#allocation12 + $0x88] sm:$0xff]
    %v379 = vld [vmem:[#allocation12 + $0x90] sm:$0xff]
    %v380 = vld [vmem:[#allocation12 + $0x98] sm:$0xff]
    %382 = vset.pattern.permute.xlu0 0
    %383 = vperm.xlu0 %382, %v361
    %v384 = vpop.permute.xlu0 %383
    %387 = vset.pattern.permute.xlu0 0
    %388 = vperm.xlu0 %387, %v362
    %v389 = vpop.permute.xlu0 %388
    %392 = vset.pattern.permute.xlu0 0
    %393 = vperm.xlu0 %392, %v363
    %v394 = vpop.permute.xlu0 %393
    %397 = vset.pattern.permute.xlu0 0
    %398 = vperm.xlu0 %397, %v364
    %v399 = vpop.permute.xlu0 %398
    %402 = vset.pattern.permute.xlu0 0
    %403 = vperm.xlu0 %402, %v365
    %v404 = vpop.permute.xlu0 %403
    %407 = vset.pattern.permute.xlu0 0
    %408 = vperm.xlu0 %407, %v366
    %v409 = vpop.permute.xlu0 %408
    %412 = vset.pattern.permute.xlu0 0
    %413 = vperm.xlu0 %412, %v367
    %v414 = vpop.permute.xlu0 %413
    %417 = vset.pattern.permute.xlu0 0
    %418 = vperm.xlu0 %417, %v368
    %v419 = vpop.permute.xlu0 %418
    %422 = vset.pattern.permute.xlu0 0
    %423 = vperm.xlu0 %422, %v369
    %v424 = vpop.permute.xlu0 %423
    %427 = vset.pattern.permute.xlu0 0
    %428 = vperm.xlu0 %427, %v370
    %v429 = vpop.permute.xlu0 %428
    %432 = vset.pattern.permute.xlu0 0
    %433 = vperm.xlu0 %432, %v371
    %v434 = vpop.permute.xlu0 %433
    %437 = vset.pattern.permute.xlu0 0
    %438 = vperm.xlu0 %437, %v372
    %v439 = vpop.permute.xlu0 %438
    %442 = vset.pattern.permute.xlu0 0
    %443 = vperm.xlu0 %442, %v373
    %v444 = vpop.permute.xlu0 %443
    %447 = vset.pattern.permute.xlu0 0
    %448 = vperm.xlu0 %447, %v374
    %v449 = vpop.permute.xlu0 %448
    %452 = vset.pattern.permute.xlu0 0
    %453 = vperm.xlu0 %452, %v375
    %v454 = vpop.permute.xlu0 %453
    %457 = vset.pattern.permute.xlu0 0
    %458 = vperm.xlu0 %457, %v376
    %v459 = vpop.permute.xlu0 %458
    %462 = vset.pattern.permute.xlu0 0
    %463 = vperm.xlu0 %462, %v377
    %v464 = vpop.permute.xlu0 %463
    %467 = vset.pattern.permute.xlu0 0
    %468 = vperm.xlu0 %467, %v378
    %v469 = vpop.permute.xlu0 %468
    %472 = vset.pattern.permute.xlu0 0
    %473 = vperm.xlu0 %472, %v379
    %v474 = vpop.permute.xlu0 %473
    %477 = vset.pattern.permute.xlu0 0
    %478 = vperm.xlu0 %477, %v380
    %v479 = vpop.permute.xlu0 %478
    %vm481 = vcmask 785408
    %v483 = vsel %vm481, %v341, 0
    %v486 = vsel %vm481, %v342, 0
    %v489 = vsel %vm481, %v343, 0
    %v492 = vsel %vm481, %v344, 0
    %v495 = vsel %vm481, %v345, 0
    %v498 = vsel %vm481, %v346, 0
    %v501 = vsel %vm481, %v347, 0
    %v504 = vsel %vm481, %v348, 0
    %v507 = vsel %vm481, %v349, 0
    %v510 = vsel %vm481, %v350, 0
    %v513 = vsel %vm481, %v351, 0
    %v516 = vsel %vm481, %v352, 0
    %v519 = vsel %vm481, %v353, 0
    %v522 = vsel %vm481, %v354, 0
    %v525 = vsel %vm481, %v355, 0
    %v528 = vsel %vm481, %v356, 0
    %v531 = vsel %vm481, %v357, 0
    %v534 = vsel %vm481, %v358, 0
    %v537 = vsel %vm481, %v359, 0
    %v540 = vsel %vm481, %v360, 0
    %542 = vmatpush.msra.mxu0 0.0
    %543 = vmatpush.msra.mxu0 0.0
    %544 = vmatpush.msra.mxu0 0.0
    %545 = vmatpush.msra.mxu0 0.0
    %546 = vmatpush.msra.mxu0 %v340
    %547 = vmatpush.msra.mxu0 %v339
    %548 = vmatpush.msra.mxu0 %v338
    %549 = vmatpush.msra.mxu0 %v337
    %550 = vmatpush.msra.mxu0 %v336
    %551 = vmatpush.msra.mxu0 %v335
    %552 = vmatpush.msra.mxu0 %v334
    %553 = vmatpush.msra.mxu0 %v333
    %554 = vmatpush.msra.mxu0 %v332
    %555 = vmatpush.msra.mxu0 %v331
    %556 = vmatpush.msra.mxu0 %v330
    %557 = vmatpush.msra.mxu0 %v329
    %558 = vmatmul.f32.gmra.mxu0 %v483
    %v559 = vpop.f32.mrf.mxu0
    %v560 = vadd.f32 %v384, %v559
    %561 = vmatmul.f32.gmra.mxu0 %v486
    %v562 = vpop.f32.mrf.mxu0
    %v563 = vadd.f32 %v389, %v562
    %564 = vmatmul.f32.gmra.mxu0 %v489
    %v565 = vpop.f32.mrf.mxu0
    %v566 = vadd.f32 %v394, %v565
    %567 = vmatmul.f32.gmra.mxu0 %v492
    %v568 = vpop.f32.mrf.mxu0
    %v569 = vadd.f32 %v399, %v568
    %570 = vmatmul.f32.gmra.mxu0 %v495
    %v571 = vpop.f32.mrf.mxu0
    %v572 = vadd.f32 %v404, %v571
    %573 = vmatmul.f32.gmra.mxu0 %v498
    %v574 = vpop.f32.mrf.mxu0
    %v575 = vadd.f32 %v409, %v574
    %576 = vmatmul.f32.gmra.mxu0 %v501
    %v577 = vpop.f32.mrf.mxu0
    %v578 = vadd.f32 %v414, %v577
    %579 = vmatmul.f32.gmra.mxu0 %v504
    %v580 = vpop.f32.mrf.mxu0
    %v581 = vadd.f32 %v419, %v580
    %582 = vmatmul.f32.gmra.mxu0 %v507
    %v583 = vpop.f32.mrf.mxu0
    %v584 = vadd.f32 %v424, %v583
    %585 = vmatmul.f32.gmra.mxu0 %v510
    %v586 = vpop.f32.mrf.mxu0
    %v587 = vadd.f32 %v429, %v586
    %588 = vmatmul.f32.gmra.mxu0 %v513
    %v589 = vpop.f32.mrf.mxu0
    %v590 = vadd.f32 %v434, %v589
    %591 = vmatmul.f32.gmra.mxu0 %v516
    %v592 = vpop.f32.mrf.mxu0
    %v593 = vadd.f32 %v439, %v592
    %594 = vmatmul.f32.gmra.mxu0 %v519
    %v595 = vpop.f32.mrf.mxu0
    %v596 = vadd.f32 %v444, %v595
    %597 = vmatmul.f32.gmra.mxu0 %v522
    %v598 = vpop.f32.mrf.mxu0
    %v599 = vadd.f32 %v449, %v598
    %600 = vmatmul.f32.gmra.mxu0 %v525
    %v601 = vpop.f32.mrf.mxu0
    %v602 = vadd.f32 %v454, %v601
    %603 = vmatmul.f32.gmra.mxu0 %v528
    %v604 = vpop.f32.mrf.mxu0
    %v605 = vadd.f32 %v459, %v604
    %606 = vmatmul.f32.gmra.mxu0 %v531
    %v607 = vpop.f32.mrf.mxu0
    %v608 = vadd.f32 %v464, %v607
    %609 = vmatmul.f32.gmra.mxu0 %v534
    %v610 = vpop.f32.mrf.mxu0
    %v611 = vadd.f32 %v469, %v610
    %612 = vmatmul.f32.gmra.mxu0 %v537
    %v613 = vpop.f32.mrf.mxu0
    %v614 = vadd.f32 %v474, %v613
    %615 = vmatmul.f32.gmra.mxu0 %v540
    %v616 = vpop.f32.mrf.mxu0
    %v617 = vadd.f32 %v479, %v616
    %618 = vdwg.mxu0
    %v619 = vtanh.pop %v560
    %v620 = vtanh.pop %v563
    %v621 = vtanh.pop %v566
    %v622 = vtanh.pop %v569
    %v623 = vtanh.pop %v572
    %v624 = vtanh.pop %v575
    %v625 = vtanh.pop %v578
    %v626 = vtanh.pop %v581
    %v627 = vtanh.pop %v584
    %v628 = vtanh.pop %v587
    %v629 = vtanh.pop %v590
    %v630 = vtanh.pop %v593
    %v631 = vtanh.pop %v596
    %v632 = vtanh.pop %v599
    %v633 = vtanh.pop %v602
    %v634 = vtanh.pop %v605
    %v635 = vtanh.pop %v608
    %v636 = vtanh.pop %v611
    %v637 = vtanh.pop %v614
    %v638 = vtanh.pop %v617
    %v639 = vld [vmem:[#allocation14] sm:$0xff]
    %v640 = vld [vmem:[#allocation14 + $0x8] sm:$0xff]
    %v641 = vld [vmem:[#allocation14 + $0x10] sm:$0xff]
    %v642 = vld [vmem:[#allocation14 + $0x18] sm:$0xff]
    %v643 = vld [vmem:[#allocation14 + $0x20] sm:$0xff]
    %v644 = vld [vmem:[#allocation14 + $0x28] sm:$0xff]
    %v645 = vld [vmem:[#allocation14 + $0x30] sm:$0xff]
    %v646 = vld [vmem:[#allocation14 + $0x38] sm:$0xff]
    %v647 = vld [vmem:[#allocation14 + $0x40] sm:$0xff]
    %v648 = vld [vmem:[#allocation14 + $0x48] sm:$0xff]
    %v649 = vld [vmem:[#allocation14 + $0x50] sm:$0xff]
    %v650 = vld [vmem:[#allocation14 + $0x58] sm:$0xff]
    %v651 = vld [vmem:[#allocation15] sm:$0xff]
    %v652 = vld [vmem:[#allocation15 + $0x8] sm:$0xff]
    %v653 = vld [vmem:[#allocation15 + $0x10] sm:$0xff]
    %v654 = vld [vmem:[#allocation15 + $0x18] sm:$0xff]
    %v655 = vld [vmem:[#allocation15 + $0x20] sm:$0xff]
    %v656 = vld [vmem:[#allocation15 + $0x28] sm:$0xff]
    %658 = vset.pattern.permute.xlu0 0
    %659 = vperm.xlu0 %658, %v651
    %v660 = vpop.permute.xlu0 %659
    %663 = vset.pattern.permute.xlu0 0
    %664 = vperm.xlu0 %663, %v652
    %v665 = vpop.permute.xlu0 %664
    %668 = vset.pattern.permute.xlu0 0
    %669 = vperm.xlu0 %668, %v653
    %v670 = vpop.permute.xlu0 %669
    %673 = vset.pattern.permute.xlu0 0
    %674 = vperm.xlu0 %673, %v654
    %v675 = vpop.permute.xlu0 %674
    %678 = vset.pattern.permute.xlu0 0
    %679 = vperm.xlu0 %678, %v655
    %v680 = vpop.permute.xlu0 %679
    %683 = vset.pattern.permute.xlu0 0
    %684 = vperm.xlu0 %683, %v656
    %v685 = vpop.permute.xlu0 %684
    %vm687 = vcmask 261120
    %v689 = vsel %vm687, %v640, 0
    %v692 = vsel %vm687, %v642, 0
    %v695 = vsel %vm687, %v644, 0
    %v698 = vsel %vm687, %v646, 0
    %v701 = vsel %vm687, %v648, 0
    %v704 = vsel %vm687, %v650, 0
    %706 = vmatpush.msra.mxu0 %v634
    %707 = vmatpush.msra.mxu0 %v633
    %708 = vmatpush.msra.mxu0 %v632
    %709 = vmatpush.msra.mxu0 %v631
    %710 = vmatpush.msra.mxu0 %v630
    %711 = vmatpush.msra.mxu0 %v629
    %712 = vmatpush.msra.mxu0 %v628
    %713 = vmatpush.msra.mxu0 %v627
    %714 = vmatpush.msra.mxu0 %v626
    %715 = vmatpush.msra.mxu0 %v625
    %716 = vmatpush.msra.mxu0 %v624
    %717 = vmatpush.msra.mxu0 %v623
    %718 = vmatpush.msra.mxu0 %v622
    %719 = vmatpush.msra.mxu0 %v621
    %720 = vmatpush.msra.mxu0 %v620
    %721 = vmatpush.msra.mxu0 %v619
    %722 = vmatmul.f32.gmra.mxu0 %v639
    %v723 = vpop.f32.mrf.mxu0
    %v724 = vadd.f32 %v660, %v723
    %725 = vmatmul.f32.gmra.mxu0 %v641
    %v726 = vpop.f32.mrf.mxu0
    %v727 = vadd.f32 %v665, %v726
    %728 = vmatmul.f32.gmra.mxu0 %v643
    %v729 = vpop.f32.mrf.mxu0
    %v730 = vadd.f32 %v670, %v729
    %731 = vmatmul.f32.gmra.mxu0 %v645
    %v732 = vpop.f32.mrf.mxu0
    %v733 = vadd.f32 %v675, %v732
    %734 = vmatmul.f32.gmra.mxu0 %v647
    %v735 = vpop.f32.mrf.mxu0
    %v736 = vadd.f32 %v680, %v735
    %737 = vmatmul.f32.gmra.mxu0 %v649
    %v738 = vpop.f32.mrf.mxu0
    %v739 = vadd.f32 %v685, %v738
    %740 = vdwg.mxu0
    %741 = vmatpush.msra.mxu0 0.0
    %742 = vmatpush.msra.mxu0 0.0
    %743 = vmatpush.msra.mxu0 0.0
    %744 = vmatpush.msra.mxu0 0.0
    %745 = vmatpush.msra.mxu0 0.0
    %746 = vmatpush.msra.mxu0 0.0
    %747 = vmatpush.msra.mxu0 0.0
    %748 = vmatpush.msra.mxu0 0.0
    %749 = vmatpush.msra.mxu0 0.0
    %750 = vmatpush.msra.mxu0 0.0
    %751 = vmatpush.msra.mxu0 0.0
    %752 = vmatpush.msra.mxu0 0.0
    %753 = vmatpush.msra.mxu0 %v638
    %754 = vmatpush.msra.mxu0 %v637
    %755 = vmatpush.msra.mxu0 %v636
    %756 = vmatpush.msra.mxu0 %v635
    %757 = vmatmul.f32.gmra.mxu0 %v689
    %v758 = vpop.f32.mrf.mxu0
    %v759 = vadd.f32 %v724, %v758
    %760 = vmatmul.f32.gmra.mxu0 %v692
    %v761 = vpop.f32.mrf.mxu0
    %v762 = vadd.f32 %v727, %v761
    %763 = vmatmul.f32.gmra.mxu0 %v695
    %v764 = vpop.f32.mrf.mxu0
    %v765 = vadd.f32 %v730, %v764
    %766 = vmatmul.f32.gmra.mxu0 %v698
    %v767 = vpop.f32.mrf.mxu0
    %v768 = vadd.f32 %v733, %v767
    %769 = vmatmul.f32.gmra.mxu0 %v701
    %v770 = vpop.f32.mrf.mxu0
    %v771 = vadd.f32 %v736, %v770
    %772 = vmatmul.f32.gmra.mxu0 %v704
    %v773 = vpop.f32.mrf.mxu0
    %v774 = vadd.f32 %v739, %v773
    %775 = vdwg.mxu0
    %v776 = vmax.f32 %v765, 0.0
    %v777 = vmax.f32 %v768, 0.0
    %v778 = vand.u32 2147483647, %v765
    %v779 = vand.u32 2147483647, %v768
    %v780 = vsub.f32 0.0, %v778
    %v781 = vsub.f32 0.0, %v779
    %v782 = vmul.f32 %v780, 1.442695
    %v783 = vpow.pop %v782
    %v784 = vmul.f32 %v781, 1.442695
    %v785 = vpow.pop %v784
    %v786 = vadd.f32 %v783, 1.0
    %v787 = vadd.f32 %v785, 1.0
    %v788 = vlog2.pop %v786
    %v789 = vmul.f32 %v788, 0.6931472
    %v790 = vlog2.pop %v787
    %v791 = vmul.f32 %v790, 0.6931472
    %v792 = vadd.f32 %v776, %v789
    %v793 = vadd.f32 %v777, %v791
    %v794 = vmul.f32 %v792, 10.0
    %v795 = vmul.f32 %v793, 10.0
    %v796 = vlaneseq
    %v797 = vshrl.u32 %v796, 7
    %v798 = vadd.s32 %v797, 8
    %v799 = vlaneseq
    %v800 = vand.u32 %v799, 127
    %vm801 = vcmp.eq.s32.totalorder %v797, %v800
    %vm802 = vcmp.eq.s32.totalorder %v798, %v800
    %v803 = vsel %vm801, 1, 0
    %v804 = vsel %vm802, 1, 0
    %v805 = vcvt.s32.f32 %v803
    %v806 = vcvt.s32.f32 %v804
    %v807 = vld [vmem:[#allocation6] sm:$0xff]
    %vm808 = vcmask 130048
    %v810 = vsel %vm808, %v805, 0
    %v813 = vsel %vm808, %v806, 0
    %v816 = vsel %vm808, %v807, 0
    %818 = vmatpush.xpose.msra.mxu0 0.0
    %819 = vmatpush.xpose.msra.mxu0 0.0
    %820 = vmatpush.xpose.msra.mxu0 0.0
    %821 = vmatpush.xpose.msra.mxu0 0.0
    %822 = vmatpush.xpose.msra.mxu0 0.0
    %823 = vmatpush.xpose.msra.mxu0 0.0
    %824 = vmatpush.xpose.msra.mxu0 0.0
    %825 = vmatpush.xpose.msra.mxu0 0.0
    %826 = vmatpush.xpose.msra.mxu0 0.0
    %827 = vmatpush.xpose.msra.mxu0 0.0
    %828 = vmatpush.xpose.msra.mxu0 0.0
    %829 = vmatpush.xpose.msra.mxu0 0.0
    %830 = vmatpush.xpose.msra.mxu0 0.0
    %831 = vmatpush.xpose.msra.mxu0 0.0
    %832 = vmatpush.xpose.msra.mxu0 0.0
    %833 = vmatpush.xpose.msra.mxu0 %v816
    %834 = vmatmul.f32.gmra.mxu0 %v810
    %v835 = vpop.f32.mrf.mxu0
    %v836 = vadd.f32 0.0, %v835
    %837 = vmatmul.f32.gmra.mxu0 %v813
    %v838 = vpop.f32.mrf.mxu0
    %v839 = vadd.f32 0.0, %v838
    %840 = vdwg.mxu0
    %v841 = vsub.f32 %v836, %v759
    %v842 = vsub.f32 %v839, %v762
    %v843 = vrcp.pop %v794
    %v844 = vmul.f32 %v794, %v843
    %v845 = vsub.f32 1.0, %v844
    %v846 = vmul.f32 %v843, %v845
    %v847 = vadd.f32 %v843, %v846
    %vm848 = vweird.f32 %v794
    %vm849 = vweird.f32 %v843
    %vm850 = vmor %vm848, %vm849
    %v851 = vsel %vm850, %v843, %v847
    %v852 = vand.u32 2147483647, %v794
    %vm853 = vcmp.eq.f32.partialorder %v852, 8.507059e+37
    %v854 = vand.u32 %v794, 2147483648
    %v855 = vor.u32 1.1754944e-38, %v854
    %v856 = vsel %vm853, %v855, %v851
    %v857 = vrcp.pop %v795
    %v858 = vmul.f32 %v795, %v857
    %v859 = vsub.f32 1.0, %v858
    %v860 = vmul.f32 %v857, %v859
    %v861 = vadd.f32 %v857, %v860
    %vm862 = vweird.f32 %v795
    %vm863 = vweird.f32 %v857
    %vm864 = vmor %vm862, %vm863
    %v865 = vsel %vm864, %v857, %v861
    %v866 = vand.u32 2147483647, %v795
    %vm867 = vcmp.eq.f32.partialorder %v866, 8.507059e+37
    %v868 = vand.u32 %v795, 2147483648
    %v869 = vor.u32 1.1754944e-38, %v868
    %v870 = vsel %vm867, %v869, %v865
    %v871 = vmul.f32 %v841, %v856
    %v872 = vmul.f32 %v842, %v870
    %v873 = vmul.f32 %v771, %v871
    %v874 = vmul.f32 %v774, %v872
    %s875 = smul.u32 0, 8
    %v876 = vstv %s875
    %v877 = vadd.s32 %v800, %v876
    %vm878 = vcmp.lt.s32.totalorder %v877, 8
    %v879 = vsel %vm878, 1, 0
    %vm880 = vcmp.eq.s32.totalorder %v879, 1
    %v881 = vsel %vm880, %v873, 0.0
    %v882 = vsel %vm880, %v874, 0.0
    %vm883 = vcmask 64512
    %v884 = vsel %vm883, %v881, inf
    %v885 = vsel %vm883, %v882, inf
    %v886 = vmin.f32 %v884, %v885
    %887 = vmin.xlane.f32.xlu0 %v886
    %v888 = vpop.xlane.xlu0 %887
    %v889 = vrot.slane %v888, 4
    %v890 = vmin.f32 %v888, %v889
    %v891 = vrot.slane %v890, 2
    %v892 = vmin.f32 %v890, %v891
    %v893 = vrot.slane %v892, 1
    %v894 = vmin.f32 %v892, %v893
    %s895 = vtos %v894
    %p896 = scmp.lt.f32.partialorder %s895, -7.0
    // Predicated region
    $region66: #{_forward_impl.1} parent=1 // pred_check
      %p897 = pneg %p896
    $region67: #{_forward_impl.1} parent=1 // pred_check_branch
      %899 = sbr.rel (%p897) target = $region69
    $region68: #{_forward_impl.1} parent=1 // pred_region
      %vm900 = vcmp.lt.f32.partialorder %v873, -0.1
      %vm901 = vcmp.lt.f32.partialorder %v874, -0.1
      %v902 = vmul.f32 %v873, -0.5
      %v903 = vmul.f32 %v874, -0.5
      %v904 = vmul.f32 %v902, %v873
      %v905 = vmul.f32 %v903, %v874
      %v906 = vsub.f32 %v904, 4.8
      %v907 = vsub.f32 %v905, 4.8
      %v908 = vsub.f32 %v873, 13.0
      %v909 = vsub.f32 %v874, 13.0
      %v910 = vmul.f32 %v908, 2509.0
      %v911 = vmul.f32 %v909, 2509.0
      %v912 = vsub.f32 %v873, 40.0
      %v913 = vsub.f32 %v874, 40.0
      %v914 = vmul.f32 %v912, %v912
      %v915 = vmul.f32 %v913, %v913
      %v916 = vsub.f32 %v873, 5.0
      %v917 = vsub.f32 %v874, 5.0
      %v918 = vmul.f32 %v914, %v916
      %v919 = vmul.f32 %v915, %v917
      %v920 = vrcp.pop %v918
      %v921 = vmul.f32 %v918, %v920
      %v922 = vsub.f32 1.0, %v921
      %v923 = vmul.f32 %v920, %v922
      %v924 = vadd.f32 %v920, %v923
      %vm925 = vweird.f32 %v918
      %vm926 = vweird.f32 %v920
      %vm927 = vmor %vm925, %vm926
      %v928 = vsel %vm927, %v920, %v924
      %v929 = vand.u32 2147483647, %v918
      %vm930 = vcmp.eq.f32.partialorder %v929, 8.507059e+37
      %v931 = vand.u32 %v918, 2147483648
      %v932 = vor.u32 1.1754944e-38, %v931
      %v933 = vsel %vm930, %v932, %v928
      %v934 = vmul.f32 %v910, %v933
      %v935 = vrcp.pop %v919
      %v936 = vmul.f32 %v919, %v935
      %v937 = vsub.f32 1.0, %v936
      %v938 = vmul.f32 %v935, %v937
      %v939 = vadd.f32 %v935, %v938
      %vm940 = vweird.f32 %v919
      %vm941 = vweird.f32 %v935
      %vm942 = vmor %vm940, %vm941
      %v943 = vsel %vm942, %v935, %v939
      %v944 = vand.u32 2147483647, %v919
      %vm945 = vcmp.eq.f32.partialorder %v944, 8.507059e+37
      %v946 = vand.u32 %v919, 2147483648
      %v947 = vor.u32 1.1754944e-38, %v946
      %v948 = vsel %vm945, %v947, %v943
      %v949 = vmul.f32 %v911, %v948
      %v950 = vadd.f32 %v906, %v934
      %v951 = vadd.f32 %v907, %v949
      %v952 = vmul.f32 %v873, -2.0
      %v953 = vmul.f32 %v874, -2.0
      %v954 = vmul.f32 %v952, 1.442695
      %v955 = vpow.pop %v954
      %v956 = vmul.f32 %v953, 1.442695
      %v957 = vpow.pop %v956
      %v958 = vsub.f32 0.0, %v955
      %v959 = vsub.f32 0.0, %v957
      %v960 = vmul.f32 %v958, 0.5
      %v961 = vmul.f32 %v959, 0.5
      %v962 = vsub.f32 %v873, 0.2
      %v963 = vsub.f32 %v874, 0.2
      %v964 = vmul.f32 %v962, %v962
      %v965 = vmul.f32 %v963, %v963
      %v966 = vsub.f32 0.0, %v964
      %v967 = vsub.f32 0.0, %v965
      %v968 = vmul.f32 %v966, 1.442695
      %v969 = vpow.pop %v968
      %v970 = vmul.f32 %v967, 1.442695
      %v971 = vpow.pop %v970
      %v972 = vmul.f32 %v969, 0.2
      %v973 = vmul.f32 %v971, 0.2
      %v974 = vsub.f32 %v960, %v972
      %v975 = vsub.f32 %v961, %v973
      %v976 = vsel %vm900, %v950, %v974
      %v977 = vsel %vm901, %v951, %v975
      %978 = vst.msk [vmem:[#allocation2] sm:$0xff] %vm883, %v976
      %979 = vst.msk [vmem:[#allocation2 + $0x8] sm:$0xff] %vm883, %v977
    $region69: #{_forward_impl.1} parent=1 // pred_fallthru
      _
    %p980 = pneg %p896
    // Predicated region
    $region70: #{_forward_impl.1} parent=1 // pred_check
      _
    $region71: #{_forward_impl.1} parent=1 // pred_check_branch
      %982 = sbr.rel (%p896) target = $region73
    $region72: #{_forward_impl.1} parent=1 // pred_region
      %v983 = vand.u32 2147483647, %v873
      %v984 = vand.u32 2147483647, %v874
      %v985 = vmul.f32 %v983, 0.70710677
      %v986 = vmul.f32 %v984, 0.70710677
      %v987 = vmul.f32 %v985, 0.3275911
      %v988 = vmul.f32 %v986, 0.3275911
      %v989 = vadd.f32 %v987, 1.0
      %v990 = vadd.f32 %v988, 1.0
      %v991 = vrcp.pop %v989
      %v992 = vmul.f32 %v989, %v991
      %v993 = vsub.f32 1.0, %v992
      %v994 = vmul.f32 %v991, %v993
      %v995 = vadd.f32 %v991, %v994
      %vm996 = vweird.f32 %v989
      %vm997 = vweird.f32 %v991
      %vm998 = vmor %vm996, %vm997
      %v999 = vsel %vm998, %v991, %v995
      %v1000 = vand.u32 2147483647, %v989
      %vm1001 = vcmp.eq.f32.partialorder %v1000, 8.507059e+37
      %v1002 = vand.u32 %v989, 2147483648
      %v1003 = vor.u32 1.1754944e-38, %v1002
      %v1004 = vsel %vm1001, %v1003, %v999
      %v1005 = vmul.f32 1.0, %v1004
      %v1006 = vrcp.pop %v990
      %v1007 = vmul.f32 %v990, %v1006
      %v1008 = vsub.f32 1.0, %v1007
      %v1009 = vmul.f32 %v1006, %v1008
      %v1010 = vadd.f32 %v1006, %v1009
      %vm1011 = vweird.f32 %v990
      %vm1012 = vweird.f32 %v1006
      %vm1013 = vmor %vm1011, %vm1012
      %v1014 = vsel %vm1013, %v1006, %v1010
      %v1015 = vand.u32 2147483647, %v990
      %vm1016 = vcmp.eq.f32.partialorder %v1015, 8.507059e+37
      %v1017 = vand.u32 %v990, 2147483648
      %v1018 = vor.u32 1.1754944e-38, %v1017
      %v1019 = vsel %vm1016, %v1018, %v1014
      %v1020 = vmul.f32 1.0, %v1019
      %v1021 = vmul.f32 %v1005, 1.0614054
      %v1022 = vmul.f32 %v1020, 1.0614054
      %v1023 = vadd.f32 %v1021, -1.4531521
      %v1024 = vadd.f32 %v1022, -1.4531521
      %v1025 = vmul.f32 %v1005, %v1023
      %v1026 = vmul.f32 %v1020, %v1024
      %v1027 = vadd.f32 %v1025, 1.4214138
      %v1028 = vadd.f32 %v1026, 1.4214138
      %v1029 = vmul.f32 %v1005, %v1027
      %v1030 = vmul.f32 %v1020, %v1028
      %v1031 = vadd.f32 %v1029, -0.28449672
      %v1032 = vadd.f32 %v1030, -0.28449672
      %v1033 = vmul.f32 %v1005, %v1031
      %v1034 = vmul.f32 %v1020, %v1032
      %v1035 = vadd.f32 %v1033, 0.2548296
      %v1036 = vadd.f32 %v1034, 0.2548296
      %v1037 = vmul.f32 %v1005, %v1035
      %v1038 = vmul.f32 %v1020, %v1036
      %v1039 = vmul.f32 %v1037, 0.5
      %v1040 = vmul.f32 %v1038, 0.5
      %v1041 = vlog2.pop %v1039
      %v1042 = vmul.f32 %v1041, 0.6931472
      %v1043 = vlog2.pop %v1040
      %v1044 = vmul.f32 %v1043, 0.6931472
      %v1045 = vmul.f32 %v985, %v985
      %v1046 = vmul.f32 %v986, %v986
      %v1047 = vsub.f32 %v1042, %v1045
      %v1048 = vsub.f32 %v1044, %v1046
      %v1049 = vsub.f32 0.0, %v985
      %v1050 = vsub.f32 0.0, %v986
      %v1051 = vmul.f32 %v1049, %v985
      %v1052 = vmul.f32 %v1050, %v986
      %v1053 = vmul.f32 %v1051, 1.442695
      %v1054 = vpow.pop %v1053
      %v1055 = vmul.f32 %v1052, 1.442695
      %v1056 = vpow.pop %v1055
      %v1057 = vmul.f32 %v1039, %v1054
      %v1058 = vmul.f32 %v1040, %v1056
      %v1059 = vsub.f32 1.0, %v1057
      %v1060 = vsub.f32 1.0, %v1058
      %v1061 = vlog2.pop %v1059
      %v1062 = vmul.f32 %v1061, 0.6931472
      %v1063 = vlog2.pop %v1060
      %v1064 = vmul.f32 %v1063, 0.6931472
      %vm1065 = vcmp.le.f32.partialorder %v873, 0.0
      %vm1066 = vcmp.le.f32.partialorder %v874, 0.0
      %v1067 = vsel %vm1065, %v1047, %v1062
      %v1068 = vsel %vm1066, %v1048, %v1064
      %1069 = vst.msk [vmem:[#allocation2] sm:$0xff] %vm883, %v1067
      %1070 = vst.msk [vmem:[#allocation2 + $0x8] sm:$0xff] %vm883, %v1068
    $region73: #{_forward_impl.1} parent=1 // pred_fallthru
      _
    %v1071 = vmul.f32 %v871, 0.5
    %v1072 = vmul.f32 %v872, 0.5
    %v1073 = vmul.f32 %v1071, %v871
    %v1074 = vmul.f32 %v1072, %v872
    %v1075 = vlog2.pop %v794
    %v1076 = vmul.f32 %v1075, 0.6931472
    %v1077 = vlog2.pop %v795
    %v1078 = vmul.f32 %v1077, 0.6931472
    %v1079 = vadd.f32 %v1073, %v1076
    %v1080 = vadd.f32 %v1074, %v1078
    %v1081 = vld [vmem:[#allocation2] sm:$0xff]
    %v1082 = vld [vmem:[#allocation2 + $0x8] sm:$0xff]
    %v1083 = vsub.f32 %v1079, %v1081
    %v1084 = vsub.f32 %v1080, %v1082
    %v1085 = vsel %vm883, %v1083, 0.0
    %v1086 = vsel %vm883, %v1084, 0.0
    %v1087 = vadd.f32 %v1085, %v1086
    %v1088 = vrot.slane %v1087, 4
    %v1089 = vadd.f32 %v1087, %v1088
    %v1090 = vrot.slane %v1089, 2
    %v1091 = vadd.f32 %v1089, %v1090
    %v1092 = vrot.slane %v1091, 1
    %v1093 = vadd.f32 %v1091, %v1092
    %v1094 = vrcp.pop 16.0
    %v1095 = vmul.f32 16.0, %v1094
    %v1096 = vsub.f32 1.0, %v1095
    %v1097 = vmul.f32 %v1094, %v1096
    %v1098 = vadd.f32 %v1094, %v1097
    %vm1099 = vweird.f32 %v1094
    %v1100 = vsel %vm1099, %v1094, %v1098
    %v1101 = vmul.f32 %v1093, %v1100
    %vm1102 = vcmask 57344
    %1103 = vst.msk [vmem:[#allocation17] sm:$0x1] %vm1102, %v1101
    // Predicated region
    $region74: #{_forward_impl.1} parent=1 // pred_check
      _
    $region75: #{_forward_impl.1} parent=1 // pred_check_branch
      %1105 = sbr.rel (0) target = $region77
    $region76: #{_forward_impl.1} parent=1 // pred_region
      %1107 = vsyncadd [#allocation5], 0
      %s1109 = sshll.u32 [#allocation17], 4
      %s1110 = int_to_ptr.vmem [resolvable:$true] %s1109
      %s1111 = sshll.u32 %s8, 4
      %s1112 = int_to_ptr.hbm [resolvable:$true] %s1111
      %1114 = dma.vmem_to_hbm [thread:$0]  %s1110, 16, %s1112, [#allocation5]
    $region77: #{_forward_impl.1} parent=1 // pred_fallthru
      _
    // Predicated region
    $region78: #{_forward_impl.1} parent=1 // pred_check
      _
    $region79: #{_forward_impl.1} parent=1 // pred_check_branch
      %1116 = sbr.rel (0) target = $region81
    $region80: #{_forward_impl.1} parent=1 // pred_region
      %1118 = dma.done [#allocation5], 16
    $region81: #{_forward_impl.1} parent=1 // pred_fallthru
      _
    %1119 = vsyncpa [#allocation4], 1
    %1120 = vsyncpa [#allocation7], 1
    %1121 = vsyncpa [#allocation10], 1
    %1122 = vsyncpa [#allocation13], 1
    %1123 = vsyncpa [#allocation16], 1
    %1124 = vsyncpa [#allocation5], 1

</llo_original>
